<compile_context>
chip_gen: v5e
topology: v5e:2x2
jax: 0.10.0
libtpu: 0.0.40
codegen_flags: <defaults>
</compile_context>

<pallas_src>
import functools

import jax
import jax.numpy as jnp
from jax.experimental import pallas as pl
from jax.experimental.pallas import tpu as pltpu

LANE = 128
SUBLANE = 8


def _round_up(n, m):
    return ((n + m - 1) // m) * m


def _default_act_dtype():
    """bf16 activations on v6e/v7x (bf16-native VPU/EUP); f32 on v5e and older."""
    try:
        kind = jax.devices()[0].device_kind.lower()
    except Exception:
        return jnp.float32
    if ("v6" in kind) or ("v7" in kind):
        return jnp.bfloat16
    return jnp.float32


def _mlp_kernel(regress, act_dtype, x_ref, *refs):
    """Fused MLP forward on one (batch_tile, in_pad) tile; weights resident in VMEM."""
    *wb_refs, o_ref = refs
    n_layers = len(wb_refs) // 2

    h = x_ref[...]                                        # (tile, in_pad), compute dtype
    for i in range(n_layers):
        w = wb_refs[2 * i][...]                           # (K_pad, N_pad), bf16
        b = wb_refs[2 * i + 1][...]                       # (1, N_pad), f32
        # MXU matmul in the weights' dtype (bf16), f32 accumulation; f32 bias add.
        h = jnp.dot(h.astype(w.dtype), w, preferred_element_type=jnp.float32) + b
        if i < n_layers - 1:
            h = jnp.tanh(h.astype(act_dtype))             # EUP; bf16 on v6e/v7x
        elif not regress:
            h = jax.nn.sigmoid(h.astype(act_dtype))       # EUP; bf16 on v6e/v7x
    o_ref[...] = h.astype(o_ref.dtype)


def prepare_params(params, *, compute_dtype=jnp.bfloat16):
    """Pad feature dims to lane (128) multiples and cast weights to the MXU dtype.

    Call ONCE at init time. params: list of (W, b) with W shaped
    (fan_in, fan_out) (i.e. torch W.T) and b shaped (fan_out,) or (1, fan_out).
    Returns the flat tuple (W0, b0, W1, b1, ...) of padded arrays
    (weights in compute_dtype, biases in f32).
    """
    flat = []
    prev = _round_up(params[0][0].shape[0], LANE)
    for w, b in params:
        fi, fo = w.shape
        fo_pad = _round_up(fo, LANE)
        w = jnp.asarray(w).astype(compute_dtype)
        b = jnp.asarray(b, jnp.float32).reshape(1, -1)
        flat.append(jnp.pad(w, ((0, prev - fi), (0, fo_pad - fo))))
        flat.append(jnp.pad(b, ((0, 0), (0, fo_pad - fo))))
        prev = fo_pad
    return tuple(flat)


def mlp_forward(x, *flat, out_dim, regress=False, act_dtype=jnp.float32,
                batch_tile=512):
    """Fused MLP forward.

    x: (B, in_dim) f32.  flat: pre-padded (W0, b0, W1, b1, ...) from
    prepare_params (weights in the MXU compute dtype, biases f32, all feature
    dims padded to multiples of 128).  Returns (B, out_dim) in x.dtype.
    """
    B, in_dim = x.shape
    compute_dtype = flat[0].dtype
    in_pad = flat[0].shape[0]
    out_pad = flat[-1].shape[1]

    # Batch tile: keep >= 2 grid steps whenever B is big enough (so the
    # "parallel" batch axis can shard across v7x's two TensorCores) while
    # minimizing zero-row padding; cap at batch_tile for large B.
    B8 = _round_up(B, SUBLANE)
    if B8 <= 2 * SUBLANE:
        tile = B8
    else:
        tile = max(SUBLANE, min(batch_tile, _round_up(pl.cdiv(B, 2), SUBLANE)))
    B_pad = _round_up(B, tile)

    # Cast input to the MXU dtype in the wrapper (halves input DMA bytes); the
    # padded zero rows/cols stay exactly zero through every layer.
    x_p = jnp.pad(x.astype(compute_dtype), ((0, B_pad - B), (0, in_pad - in_dim)))

    # Explicit VMEM budget: single-buffered resident weights + double-buffered
    # input/output tiles + slack; clamped to v7x's 64 MiB physical ceiling.
    weight_bytes = sum(int(a.size) * a.dtype.itemsize for a in flat)
    io_bytes = 2 * (tile * in_pad * x_p.dtype.itemsize
                    + tile * out_pad * jnp.dtype(x.dtype).itemsize)
    vmem_limit = int(min(max(weight_bytes + io_bytes + (4 << 20), 16 << 20), 64 << 20))

    grid = (B_pad // tile,)
    const = lambda i: (0, 0)
    resident = pl.Buffered(1)   # constant index_map -> never re-fetched; no double-buffer

    out = pl.pallas_call(
        functools.partial(_mlp_kernel, regress, act_dtype),
        out_shape=jax.ShapeDtypeStruct((B_pad, out_pad), x.dtype),
        grid=grid,
        in_specs=[pl.BlockSpec((tile, in_pad), lambda i: (i, 0))]
                 + [pl.BlockSpec(a.shape, const, pipeline_mode=resident) for a in flat],
        out_specs=pl.BlockSpec((tile, out_pad), lambda i: (i, 0)),
        compiler_params=pltpu.CompilerParams(
            dimension_semantics=("parallel",),
            vmem_limit_bytes=vmem_limit),
    )(x_p, *flat)

    # Slice away batch padding and the lane-padded output columns.
    return out[:B, :out_dim]


def init_linear(key, fan_in, fan_out):
    """torch.nn.Linear-style init; W returned as (fan_in, fan_out) = torch W.T."""
    kw, kb = jax.random.split(key)
    bound = 1.0 / jnp.sqrt(jnp.float32(fan_in))
    w = jax.random.uniform(kw, (fan_in, fan_out), jnp.float32, -bound, bound)
    b = jax.random.uniform(kb, (1, fan_out), jnp.float32, -bound, bound)
    return w, b


def ref_forward(x, params, *, compute_dtype=jnp.bfloat16, act_dtype=jnp.float32,
                regress=False):
    """Pure-JAX reference with the identical dtype recipe
    (bf16 MXU / f32 accumulation / act_dtype activations)."""
    h = x.astype(compute_dtype)
    n = len(params)
    for i, (w, b) in enumerate(params):
        h = jnp.dot(h.astype(compute_dtype), w.astype(compute_dtype),
                    preferred_element_type=jnp.float32) \
            + jnp.asarray(b, jnp.float32).reshape(1, -1)
        if i < n - 1:
            h = jnp.tanh(h.astype(act_dtype))
        elif not regress:
            h = jax.nn.sigmoid(h.astype(act_dtype))
    return h.astype(x.dtype)


if __name__ == "__main__":
    # MLP defaults with small-but-nontrivial shapes:
    # in_dim=4 (n_heads=1), n_hidden_units=32, n_hidden_layers=2, out_dim=1.
    in_dim, hidden, out_dim = 4, 32, 1
    n_hidden_layers = 2
    batch = 300          # not a multiple of the tile; exercises padding + a 2-step grid

    key = jax.random.PRNGKey(0)
    keys = jax.random.split(key, n_hidden_layers + 3)
    x = jax.random.normal(keys[0], (batch, in_dim), jnp.float32)

    dims = [in_dim] + [hidden] * (n_hidden_layers + 1) + [out_dim]
    params = [init_linear(keys[i + 1], dims[i], dims[i + 1])
              for i in range(len(dims) - 1)]

    # Pad/cast weights ONCE (hoisted out of the forward path).
    flat = prepare_params(params, compute_dtype=jnp.bfloat16)
    act_dtype = _default_act_dtype()

    fwd = jax.jit(functools.partial(mlp_forward, out_dim=out_dim, regress=False,
                                    act_dtype=act_dtype, batch_tile=512))
    y = fwd(x, *flat)
    jax.block_until_ready(y)
    assert y.shape == (batch, out_dim)

    # Reference uses the identical dtype recipe; tolerance adapts to the
    # activation dtype (bf16 EUP implementations may differ by a few ulps).
    y_ref = ref_forward(x, params, compute_dtype=jnp.bfloat16,
                        act_dtype=act_dtype, regress=False)
    tol = 1e-5 if jnp.dtype(act_dtype) == jnp.dtype(jnp.float32) else 3e-2
    assert jnp.allclose(y, y_ref, atol=tol, rtol=tol), \
        float(jnp.max(jnp.abs(y - y_ref)))

    print("KERNEL_OK")
</pallas_src>

<mosaic_0001>
module attributes {stable_mosaic.version = 11 : i64} {
  func.func @_mlp_kernel(%arg0: i32, %arg1: memref<152x128xbf16, #tpu.memory_space<vmem>>, %arg2: memref<128x128xbf16, #tpu.memory_space<vmem>>, %arg3: memref<1x128xf32, #tpu.memory_space<vmem>>, %arg4: memref<128x128xbf16, #tpu.memory_space<vmem>>, %arg5: memref<1x128xf32, #tpu.memory_space<vmem>>, %arg6: memref<128x128xbf16, #tpu.memory_space<vmem>>, %arg7: memref<1x128xf32, #tpu.memory_space<vmem>>, %arg8: memref<128x128xbf16, #tpu.memory_space<vmem>>, %arg9: memref<1x128xf32, #tpu.memory_space<vmem>>, %arg10: memref<152x128xf32, #tpu.memory_space<vmem>>) attributes {dimension_semantics = [#tpu.dimension_semantics<parallel>], iteration_bounds = array<i64: 2>, scalar_prefetch = 0 : i64, scratch_operands = 0 : i64, tpu.core_type = #tpu.core_type<tc>, window_params = [{transform_indices = @transform_0, window_bounds = array<i64: 152, 128>}, {pipeline_mode = #tpu.pipeline_mode<synchronous>, transform_indices = @transform_1, window_bounds = array<i64: 128, 128>}, {pipeline_mode = #tpu.pipeline_mode<synchronous>, transform_indices = @transform_2, window_bounds = array<i64: 1, 128>}, {pipeline_mode = #tpu.pipeline_mode<synchronous>, transform_indices = @transform_3, window_bounds = array<i64: 128, 128>}, {pipeline_mode = #tpu.pipeline_mode<synchronous>, transform_indices = @transform_4, window_bounds = array<i64: 1, 128>}, {pipeline_mode = #tpu.pipeline_mode<synchronous>, transform_indices = @transform_5, window_bounds = array<i64: 128, 128>}, {pipeline_mode = #tpu.pipeline_mode<synchronous>, transform_indices = @transform_6, window_bounds = array<i64: 1, 128>}, {pipeline_mode = #tpu.pipeline_mode<synchronous>, transform_indices = @transform_7, window_bounds = array<i64: 128, 128>}, {pipeline_mode = #tpu.pipeline_mode<synchronous>, transform_indices = @transform_8, window_bounds = array<i64: 1, 128>}, {transform_indices = @transform_9, window_bounds = array<i64: 152, 128>}]} {
    %c0 = arith.constant 0 : index
    %c0_0 = arith.constant 0 : index
    %0 = vector.load %arg1[%c0, %c0_0] : memref<152x128xbf16, #tpu.memory_space<vmem>>, vector<152x128xbf16>
    %c0_1 = arith.constant 0 : index
    %c0_2 = arith.constant 0 : index
    %1 = vector.load %arg2[%c0_1, %c0_2] : memref<128x128xbf16, #tpu.memory_space<vmem>>, vector<128x128xbf16>
    %c0_3 = arith.constant 0 : index
    %c0_4 = arith.constant 0 : index
    %2 = vector.load %arg3[%c0_3, %c0_4] : memref<1x128xf32, #tpu.memory_space<vmem>>, vector<1x128xf32>
    %cst = arith.constant dense<0.000000e+00> : vector<152x128xf32>
    %3 = tpu.matmul %0, %1, %cst {dimension_numbers = #tpu.dot_dimension_numbers<[1], [0], [0], [1], [0, 0, 1, 1], [], []>} : vector<152x128xbf16>, vector<128x128xbf16>, vector<152x128xf32> -> vector<152x128xf32>
    %4 = vector.broadcast %2 : vector<1x128xf32> to vector<152x128xf32>
    %5 = arith.addf %3, %4 : vector<152x128xf32>
    %6 = math.tanh %5 : vector<152x128xf32>
    %c0_5 = arith.constant 0 : index
    %c0_6 = arith.constant 0 : index
    %7 = vector.load %arg4[%c0_5, %c0_6] : memref<128x128xbf16, #tpu.memory_space<vmem>>, vector<128x128xbf16>
    %c0_7 = arith.constant 0 : index
    %c0_8 = arith.constant 0 : index
    %8 = vector.load %arg5[%c0_7, %c0_8] : memref<1x128xf32, #tpu.memory_space<vmem>>, vector<1x128xf32>
    %9 = arith.truncf %6 : vector<152x128xf32> to vector<152x128xbf16>
    %cst_9 = arith.constant dense<0.000000e+00> : vector<152x128xf32>
    %10 = tpu.matmul %9, %7, %cst_9 {dimension_numbers = #tpu.dot_dimension_numbers<[1], [0], [0], [1], [0, 0, 1, 1], [], []>} : vector<152x128xbf16>, vector<128x128xbf16>, vector<152x128xf32> -> vector<152x128xf32>
    %11 = vector.broadcast %8 : vector<1x128xf32> to vector<152x128xf32>
    %12 = arith.addf %10, %11 : vector<152x128xf32>
    %13 = math.tanh %12 : vector<152x128xf32>
    %c0_10 = arith.constant 0 : index
    %c0_11 = arith.constant 0 : index
    %14 = vector.load %arg6[%c0_10, %c0_11] : memref<128x128xbf16, #tpu.memory_space<vmem>>, vector<128x128xbf16>
    %c0_12 = arith.constant 0 : index
    %c0_13 = arith.constant 0 : index
    %15 = vector.load %arg7[%c0_12, %c0_13] : memref<1x128xf32, #tpu.memory_space<vmem>>, vector<1x128xf32>
    %16 = arith.truncf %13 : vector<152x128xf32> to vector<152x128xbf16>
    %cst_14 = arith.constant dense<0.000000e+00> : vector<152x128xf32>
    %17 = tpu.matmul %16, %14, %cst_14 {dimension_numbers = #tpu.dot_dimension_numbers<[1], [0], [0], [1], [0, 0, 1, 1], [], []>} : vector<152x128xbf16>, vector<128x128xbf16>, vector<152x128xf32> -> vector<152x128xf32>
    %18 = vector.broadcast %15 : vector<1x128xf32> to vector<152x128xf32>
    %19 = arith.addf %17, %18 : vector<152x128xf32>
    %20 = math.tanh %19 : vector<152x128xf32>
    %c0_15 = arith.constant 0 : index
    %c0_16 = arith.constant 0 : index
    %21 = vector.load %arg8[%c0_15, %c0_16] : memref<128x128xbf16, #tpu.memory_space<vmem>>, vector<128x128xbf16>
    %c0_17 = arith.constant 0 : index
    %c0_18 = arith.constant 0 : index
    %22 = vector.load %arg9[%c0_17, %c0_18] : memref<1x128xf32, #tpu.memory_space<vmem>>, vector<1x128xf32>
    %23 = arith.truncf %20 : vector<152x128xf32> to vector<152x128xbf16>
    %cst_19 = arith.constant dense<0.000000e+00> : vector<152x128xf32>
    %24 = tpu.matmul %23, %21, %cst_19 {dimension_numbers = #tpu.dot_dimension_numbers<[1], [0], [0], [1], [0, 0, 1, 1], [], []>} : vector<152x128xbf16>, vector<128x128xbf16>, vector<152x128xf32> -> vector<152x128xf32>
    %25 = vector.broadcast %22 : vector<1x128xf32> to vector<152x128xf32>
    %26 = arith.addf %24, %25 : vector<152x128xf32>
    %27 = arith.negf %26 : vector<152x128xf32>
    %28 = math.exp %27 : vector<152x128xf32>
    %cst_20 = arith.constant 1.000000e+00 : f32
    %29 = vector.broadcast %cst_20 : f32 to vector<152x128xf32>
    %30 = arith.addf %29, %28 : vector<152x128xf32>
    %31 = arith.divf %29, %30 : vector<152x128xf32>
    %c0_21 = arith.constant 0 : index
    %c0_22 = arith.constant 0 : index
    %32 = vector.load %arg10[%c0_21, %c0_22] : memref<152x128xf32, #tpu.memory_space<vmem>>, vector<152x128xf32>
    tpu.vector_store %arg10[%c0_21, %c0_22], %31 {strides = array<i32>} : memref<152x128xf32, #tpu.memory_space<vmem>>, vector<152x128xf32>,
    return
  }
  func.func @transform_0(%arg0: i32) -> (i32, i32) {
    %c0_i32 = arith.constant 0 : i32
    %c0_i32_0 = arith.constant 0 : i32
    return %arg0, %c0_i32 : i32, i32
  }
  func.func @transform_1(%arg0: i32) -> (i32, i32) {
    %c0_i32 = arith.constant 0 : i32
    %c0_i32_0 = arith.constant 0 : i32
    %c0_i32_1 = arith.constant 0 : i32
    return %c0_i32, %c0_i32_0 : i32, i32
  }
  func.func @transform_2(%arg0: i32) -> (i32, i32) {
    %c0_i32 = arith.constant 0 : i32
    %c0_i32_0 = arith.constant 0 : i32
    %c0_i32_1 = arith.constant 0 : i32
    return %c0_i32, %c0_i32_0 : i32, i32
  }
  func.func @transform_3(%arg0: i32) -> (i32, i32) {
    %c0_i32 = arith.constant 0 : i32
    %c0_i32_0 = arith.constant 0 : i32
    %c0_i32_1 = arith.constant 0 : i32
    return %c0_i32, %c0_i32_0 : i32, i32
  }
  func.func @transform_4(%arg0: i32) -> (i32, i32) {
    %c0_i32 = arith.constant 0 : i32
    %c0_i32_0 = arith.constant 0 : i32
    %c0_i32_1 = arith.constant 0 : i32
    return %c0_i32, %c0_i32_0 : i32, i32
  }
  func.func @transform_5(%arg0: i32) -> (i32, i32) {
    %c0_i32 = arith.constant 0 : i32
    %c0_i32_0 = arith.constant 0 : i32
    %c0_i32_1 = arith.constant 0 : i32
    return %c0_i32, %c0_i32_0 : i32, i32
  }
  func.func @transform_6(%arg0: i32) -> (i32, i32) {
    %c0_i32 = arith.constant 0 : i32
    %c0_i32_0 = arith.constant 0 : i32
    %c0_i32_1 = arith.constant 0 : i32
    return %c0_i32, %c0_i32_0 : i32, i32
  }
  func.func @transform_7(%arg0: i32) -> (i32, i32) {
    %c0_i32 = arith.constant 0 : i32
    %c0_i32_0 = arith.constant 0 : i32
    %c0_i32_1 = arith.constant 0 : i32
    return %c0_i32, %c0_i32_0 : i32, i32
  }
  func.func @transform_8(%arg0: i32) -> (i32, i32) {
    %c0_i32 = arith.constant 0 : i32
    %c0_i32_0 = arith.constant 0 : i32
    %c0_i32_1 = arith.constant 0 : i32
    return %c0_i32, %c0_i32_0 : i32, i32
  }
  func.func @transform_9(%arg0: i32) -> (i32, i32) {
    %c0_i32 = arith.constant 0 : i32
    %c0_i32_0 = arith.constant 0 : i32
    return %arg0, %c0_i32 : i32, i32
  }
}

</mosaic_0001>

<llo_original>
// kernel: mlp_forward.1
$region0: #{mlp_forward.1}
  #allocation0 [shape = 'u32[]', space=smem, size = 0x4, offset = 0x4, fixed_abs, tag = 'smem constant byte address 0x4 - core index']
  #allocation1 [shape = 'u32[72,128]{1,0:T(1,128)}', space=vmem, size = 0x9000, scoped, tag = 'internal scratch']
  %s0 = inlined_call_operand.vmem [shape: bf16[304,128], index: 0, kind: input, shape index: {}]
  %s1 = inlined_call_operand.vmem [shape: bf16[128,128], index: 1, kind: input, shape index: {}]
  %s2 = inlined_call_operand.vmem [shape: f32[1,128], index: 2, kind: input, shape index: {}]
  %s3 = inlined_call_operand.vmem [shape: bf16[128,128], index: 3, kind: input, shape index: {}]
  %s4 = inlined_call_operand.vmem [shape: f32[1,128], index: 4, kind: input, shape index: {}]
  %s5 = inlined_call_operand.vmem [shape: bf16[128,128], index: 5, kind: input, shape index: {}]
  %s6 = inlined_call_operand.vmem [shape: f32[1,128], index: 6, kind: input, shape index: {}]
  %s7 = inlined_call_operand.vmem [shape: bf16[128,128], index: 7, kind: input, shape index: {}]
  %s8 = inlined_call_operand.vmem [shape: f32[1,128], index: 8, kind: input, shape index: {}]
  %s9 = inlined_call_operand.vmem [shape: f32[304,128], index: 9, kind: output, shape index: {}]
  %s10 = sld [smem:[#allocation0]]
  $region69: #{mlp_forward.1} parent=0
    _
  %s12 = ssub.s32 1, %s10
  %s13 = scalar_select 0, %s12, %s10
  loop: start=0, step=1, limit=4
  $region2: #{mlp_forward.1} parent=0 // loop_pre_header
    _
  $region3: #{mlp_forward.1} parent=0 // loop_header
    %s15 = sphi 0, %s19
    %p16 = scmp.ge.s32.totalorder %s15, 4
    %s25 = sphi 0, %s27
    %s28 = sphi 0, %s25
    %s29 = sphi 0, %s28
    %s45 = sphi 0, %s29
    %s49 = sphi 0, %s49
    %s51 = sphi 0, %s49
    %s52 = sphi 0, %s51
    %s66 = sphi 0, %s52
    %s70 = sphi 0, %s70
    %s72 = sphi 0, %s70
    %s73 = sphi 0, %s72
    %s87 = sphi 0, %s73
    %s91 = sphi 0, %s91
    %s93 = sphi 0, %s91
    %s94 = sphi 0, %s93
    %s108 = sphi 0, %s94
    %s112 = sphi 0, %s112
    %s114 = sphi 0, %s112
    %s115 = sphi 0, %s114
    %s129 = sphi 0, %s115
    %s133 = sphi 0, %s133
    %s135 = sphi 0, %s133
    %s136 = sphi 0, %s135
    %s150 = sphi 0, %s136
    %s154 = sphi 0, %s154
    %s156 = sphi 0, %s154
    %s157 = sphi 0, %s156
    %s171 = sphi 0, %s157
    %s175 = sphi 0, %s175
    %s177 = sphi 0, %s175
    %s178 = sphi 0, %s177
    %s192 = sphi 0, %s178
    %s196 = sphi 0, %s196
    %s198 = sphi 0, %s196
    %s199 = sphi 0, %s198
    %s213 = sphi 0, %s199
    %s219 = sphi 0, %s221
    %s222 = sphi 0, %s219
    %s223 = sphi 0, %s222
    %s239 = sphi 0, %s223
  $region4: #{mlp_forward.1} parent=0 // loop_header_branch
    %18 = sbr.rel (%p16) target = $region8
  $region5: #{mlp_forward.1} parent=0 // loop_body
    %s20 = ssub.s32 %s15, 1
    %s21 = ssub.s32 %s15, 2
    %s22 = sadd.s32 %s15, 1
    %s23 = ssub.s32 %s15, %s22
    %p24 = scmp.eq.s32.totalorder %s23, 0
    %s26 = sadd.s32 %s25, 1
    %s27 = scalar_select %p24, %s25, %s26
    %p30 = pneg %p24
    %p31 = scmp.eq.s32.totalorder %s15, 1
    %p32 = por %p30, %p31
    %p33 = scmp.ne.s32.totalorder %s25, %s28
    %p34 = scmp.eq.s32.totalorder %s15, 0
    %p35 = por %p33, %p34
    %p36 = scmp.ne.s32.totalorder %s25, %s28
    %p37 = scmp.eq.s32.totalorder %s20, 1
    %p38 = por %p36, %p37
    %p39 = scmp.ne.s32.totalorder %s28, %s29
    %p40 = scmp.eq.s32.totalorder %s20, 0
    %p41 = por %p39, %p40
    %p42 = scmp.ne.s32.totalorder %s28, %s29
    %p43 = scmp.eq.s32.totalorder %s21, 1
    %p44 = por %p42, %p43
    %p46 = scmp.ne.s32.totalorder %s29, %s45
    %p47 = scmp.eq.s32.totalorder %s21, 0
    %p48 = por %p46, %p47
    %s50 = sadd.s32 %s49, 1
    %p53 = scmp.eq.s32.totalorder %s15, 1
    %p54 = scmp.ne.s32.totalorder %s49, %s51
    %p55 = scmp.eq.s32.totalorder %s15, 0
    %p56 = por %p54, %p55
    %p57 = scmp.ne.s32.totalorder %s49, %s51
    %p58 = scmp.eq.s32.totalorder %s20, 1
    %p59 = por %p57, %p58
    %p60 = scmp.ne.s32.totalorder %s51, %s52
    %p61 = scmp.eq.s32.totalorder %s20, 0
    %p62 = por %p60, %p61
    %p63 = scmp.ne.s32.totalorder %s51, %s52
    %p64 = scmp.eq.s32.totalorder %s21, 1
    %p65 = por %p63, %p64
    %p67 = scmp.ne.s32.totalorder %s52, %s66
    %p68 = scmp.eq.s32.totalorder %s21, 0
    %p69 = por %p67, %p68
    %s71 = sadd.s32 %s70, 1
    %p74 = scmp.eq.s32.totalorder %s15, 1
    %p75 = scmp.ne.s32.totalorder %s70, %s72
    %p76 = scmp.eq.s32.totalorder %s15, 0
    %p77 = por %p75, %p76
    %p78 = scmp.ne.s32.totalorder %s70, %s72
    %p79 = scmp.eq.s32.totalorder %s20, 1
    %p80 = por %p78, %p79
    %p81 = scmp.ne.s32.totalorder %s72, %s73
    %p82 = scmp.eq.s32.totalorder %s20, 0
    %p83 = por %p81, %p82
    %p84 = scmp.ne.s32.totalorder %s72, %s73
    %p85 = scmp.eq.s32.totalorder %s21, 1
    %p86 = por %p84, %p85
    %p88 = scmp.ne.s32.totalorder %s73, %s87
    %p89 = scmp.eq.s32.totalorder %s21, 0
    %p90 = por %p88, %p89
    %s92 = sadd.s32 %s91, 1
    %p95 = scmp.eq.s32.totalorder %s15, 1
    %p96 = scmp.ne.s32.totalorder %s91, %s93
    %p97 = scmp.eq.s32.totalorder %s15, 0
    %p98 = por %p96, %p97
    %p99 = scmp.ne.s32.totalorder %s91, %s93
    %p100 = scmp.eq.s32.totalorder %s20, 1
    %p101 = por %p99, %p100
    %p102 = scmp.ne.s32.totalorder %s93, %s94
    %p103 = scmp.eq.s32.totalorder %s20, 0
    %p104 = por %p102, %p103
    %p105 = scmp.ne.s32.totalorder %s93, %s94
    %p106 = scmp.eq.s32.totalorder %s21, 1
    %p107 = por %p105, %p106
    %p109 = scmp.ne.s32.totalorder %s94, %s108
    %p110 = scmp.eq.s32.totalorder %s21, 0
    %p111 = por %p109, %p110
    %s113 = sadd.s32 %s112, 1
    %p116 = scmp.eq.s32.totalorder %s15, 1
    %p117 = scmp.ne.s32.totalorder %s112, %s114
    %p118 = scmp.eq.s32.totalorder %s15, 0
    %p119 = por %p117, %p118
    %p120 = scmp.ne.s32.totalorder %s112, %s114
    %p121 = scmp.eq.s32.totalorder %s20, 1
    %p122 = por %p120, %p121
    %p123 = scmp.ne.s32.totalorder %s114, %s115
    %p124 = scmp.eq.s32.totalorder %s20, 0
    %p125 = por %p123, %p124
    %p126 = scmp.ne.s32.totalorder %s114, %s115
    %p127 = scmp.eq.s32.totalorder %s21, 1
    %p128 = por %p126, %p127
    %p130 = scmp.ne.s32.totalorder %s115, %s129
    %p131 = scmp.eq.s32.totalorder %s21, 0
    %p132 = por %p130, %p131
    %s134 = sadd.s32 %s133, 1
    %p137 = scmp.eq.s32.totalorder %s15, 1
    %p138 = scmp.ne.s32.totalorder %s133, %s135
    %p139 = scmp.eq.s32.totalorder %s15, 0
    %p140 = por %p138, %p139
    %p141 = scmp.ne.s32.totalorder %s133, %s135
    %p142 = scmp.eq.s32.totalorder %s20, 1
    %p143 = por %p141, %p142
    %p144 = scmp.ne.s32.totalorder %s135, %s136
    %p145 = scmp.eq.s32.totalorder %s20, 0
    %p146 = por %p144, %p145
    %p147 = scmp.ne.s32.totalorder %s135, %s136
    %p148 = scmp.eq.s32.totalorder %s21, 1
    %p149 = por %p147, %p148
    %p151 = scmp.ne.s32.totalorder %s136, %s150
    %p152 = scmp.eq.s32.totalorder %s21, 0
    %p153 = por %p151, %p152
    %s155 = sadd.s32 %s154, 1
    %p158 = scmp.eq.s32.totalorder %s15, 1
    %p159 = scmp.ne.s32.totalorder %s154, %s156
    %p160 = scmp.eq.s32.totalorder %s15, 0
    %p161 = por %p159, %p160
    %p162 = scmp.ne.s32.totalorder %s154, %s156
    %p163 = scmp.eq.s32.totalorder %s20, 1
    %p164 = por %p162, %p163
    %p165 = scmp.ne.s32.totalorder %s156, %s157
    %p166 = scmp.eq.s32.totalorder %s20, 0
    %p167 = por %p165, %p166
    %p168 = scmp.ne.s32.totalorder %s156, %s157
    %p169 = scmp.eq.s32.totalorder %s21, 1
    %p170 = por %p168, %p169
    %p172 = scmp.ne.s32.totalorder %s157, %s171
    %p173 = scmp.eq.s32.totalorder %s21, 0
    %p174 = por %p172, %p173
    %s176 = sadd.s32 %s175, 1
    %p179 = scmp.eq.s32.totalorder %s15, 1
    %p180 = scmp.ne.s32.totalorder %s175, %s177
    %p181 = scmp.eq.s32.totalorder %s15, 0
    %p182 = por %p180, %p181
    %p183 = scmp.ne.s32.totalorder %s175, %s177
    %p184 = scmp.eq.s32.totalorder %s20, 1
    %p185 = por %p183, %p184
    %p186 = scmp.ne.s32.totalorder %s177, %s178
    %p187 = scmp.eq.s32.totalorder %s20, 0
    %p188 = por %p186, %p187
    %p189 = scmp.ne.s32.totalorder %s177, %s178
    %p190 = scmp.eq.s32.totalorder %s21, 1
    %p191 = por %p189, %p190
    %p193 = scmp.ne.s32.totalorder %s178, %s192
    %p194 = scmp.eq.s32.totalorder %s21, 0
    %p195 = por %p193, %p194
    %s197 = sadd.s32 %s196, 1
    %p200 = scmp.eq.s32.totalorder %s15, 1
    %p201 = scmp.ne.s32.totalorder %s196, %s198
    %p202 = scmp.eq.s32.totalorder %s15, 0
    %p203 = por %p201, %p202
    %p204 = scmp.ne.s32.totalorder %s196, %s198
    %p205 = scmp.eq.s32.totalorder %s20, 1
    %p206 = por %p204, %p205
    %p207 = scmp.ne.s32.totalorder %s198, %s199
    %p208 = scmp.eq.s32.totalorder %s20, 0
    %p209 = por %p207, %p208
    %p210 = scmp.ne.s32.totalorder %s198, %s199
    %p211 = scmp.eq.s32.totalorder %s21, 1
    %p212 = por %p210, %p211
    %p214 = scmp.ne.s32.totalorder %s199, %s213
    %p215 = scmp.eq.s32.totalorder %s21, 0
    %p216 = por %p214, %p215
    %s217 = ssub.s32 %s15, %s22
    %p218 = scmp.eq.s32.totalorder %s217, 0
    %s220 = sadd.s32 %s219, 1
    %s221 = scalar_select %p218, %s219, %s220
    %p224 = pneg %p218
    %p225 = scmp.eq.s32.totalorder %s15, 1
    %p226 = por %p224, %p225
    %p227 = scmp.ne.s32.totalorder %s219, %s222
    %p228 = scmp.eq.s32.totalorder %s15, 0
    %p229 = por %p227, %p228
    %p230 = scmp.ne.s32.totalorder %s219, %s222
    %p231 = scmp.eq.s32.totalorder %s20, 1
    %p232 = por %p230, %p231
    %p233 = scmp.ne.s32.totalorder %s222, %s223
    %p234 = scmp.eq.s32.totalorder %s20, 0
    %p235 = por %p233, %p234
    %p236 = scmp.ne.s32.totalorder %s222, %s223
    %p237 = scmp.eq.s32.totalorder %s21, 1
    %p238 = por %p236, %p237
    %p240 = scmp.ne.s32.totalorder %s223, %s239
    %p241 = scmp.eq.s32.totalorder %s21, 0
    %p242 = por %p240, %p241
    %p243 = scmp.le.s32.totalorder 1, %s15
    %p244 = scmp.lt.s32.totalorder %s15, 3
    %p245 = pnand %p243, %p244
    %p246 = pneg %p245
    // Predicated region
    $region9: #{mlp_forward.1} parent=5 // pred_check
      _
    $region10: #{mlp_forward.1} parent=5 // pred_check_branch
      %248 = sbr.rel (%p245) target = $region12
    $region11: #{mlp_forward.1} parent=5 // pred_region
      %s249 = ssub.s32 %s15, 1
      // Predicated region
      $region13: #{mlp_forward.1} parent=11 // pred_check
        %p250 = pneg %p62
      $region14: #{mlp_forward.1} parent=11 // pred_check_branch
        %252 = sbr.rel (%p250) target = $region16
      $region15: #{mlp_forward.1} parent=11 // pred_region
        _
      $region16: #{mlp_forward.1} parent=11 // pred_fallthru
        _
      // Predicated region
      $region17: #{mlp_forward.1} parent=11 // pred_check
        %p253 = pneg %p83
      $region18: #{mlp_forward.1} parent=11 // pred_check_branch
        %255 = sbr.rel (%p253) target = $region20
      $region19: #{mlp_forward.1} parent=11 // pred_region
        _
      $region20: #{mlp_forward.1} parent=11 // pred_fallthru
        _
      // Predicated region
      $region21: #{mlp_forward.1} parent=11 // pred_check
        %p256 = pneg %p104
      $region22: #{mlp_forward.1} parent=11 // pred_check_branch
        %258 = sbr.rel (%p256) target = $region24
      $region23: #{mlp_forward.1} parent=11 // pred_region
        _
      $region24: #{mlp_forward.1} parent=11 // pred_fallthru
        _
      // Predicated region
      $region25: #{mlp_forward.1} parent=11 // pred_check
        %p259 = pneg %p125
      $region26: #{mlp_forward.1} parent=11 // pred_check_branch
        %261 = sbr.rel (%p259) target = $region28
      $region27: #{mlp_forward.1} parent=11 // pred_region
        _
      $region28: #{mlp_forward.1} parent=11 // pred_fallthru
        _
      // Predicated region
      $region29: #{mlp_forward.1} parent=11 // pred_check
        %p262 = pneg %p146
      $region30: #{mlp_forward.1} parent=11 // pred_check_branch
        %264 = sbr.rel (%p262) target = $region32
      $region31: #{mlp_forward.1} parent=11 // pred_region
        _
      $region32: #{mlp_forward.1} parent=11 // pred_fallthru
        _
      // Predicated region
      $region33: #{mlp_forward.1} parent=11 // pred_check
        %p265 = pneg %p167
      $region34: #{mlp_forward.1} parent=11 // pred_check_branch
        %267 = sbr.rel (%p265) target = $region36
      $region35: #{mlp_forward.1} parent=11 // pred_region
        _
      $region36: #{mlp_forward.1} parent=11 // pred_fallthru
        _
      // Predicated region
      $region37: #{mlp_forward.1} parent=11 // pred_check
        %p268 = pneg %p188
      $region38: #{mlp_forward.1} parent=11 // pred_check_branch
        %270 = sbr.rel (%p268) target = $region40
      $region39: #{mlp_forward.1} parent=11 // pred_region
        _
      $region40: #{mlp_forward.1} parent=11 // pred_fallthru
        _
      // Predicated region
      $region41: #{mlp_forward.1} parent=11 // pred_check
        %p271 = pneg %p209
      $region42: #{mlp_forward.1} parent=11 // pred_check_branch
        %273 = sbr.rel (%p271) target = $region44
      $region43: #{mlp_forward.1} parent=11 // pred_region
        _
      $region44: #{mlp_forward.1} parent=11 // pred_fallthru
        _
    $region12: #{mlp_forward.1} parent=5 // pred_fallthru
      _
    %p274 = scmp.lt.s32.totalorder %s15, 2
    // Predicated region
    $region45: #{mlp_forward.1} parent=5 // pred_check
      %p275 = pneg %p274
    $region46: #{mlp_forward.1} parent=5 // pred_check_branch
      %277 = sbr.rel (%p275) target = $region48
    $region47: #{mlp_forward.1} parent=5 // pred_region
      // Predicated region
      $region49: #{mlp_forward.1} parent=47 // pred_check
        %p278 = pneg %p35
      $region50: #{mlp_forward.1} parent=47 // pred_check_branch
        %280 = sbr.rel (%p278) target = $region52
      $region51: #{mlp_forward.1} parent=47 // pred_region
        %s281 = smul.u32 19, %s15
        %p282 = scmp.lt.s32.totalorder %s281, 37
        %s283 = scalar_select %p282, %s281, 37
        %s284 = smul.addr %s283, 4
        %s285 = scalar_lea.vmem %s0, %s284
        %s286 = smul.u32 19, %s15
      $region52: #{mlp_forward.1} parent=47 // pred_fallthru
        _
    $region48: #{mlp_forward.1} parent=5 // pred_fallthru
      _
    %p287 = scmp.le.s32.totalorder 1, %s15
    %p288 = scmp.lt.s32.totalorder %s15, 3
    %p289 = pnand %p287, %p288
    %p290 = pneg %p289
    // Predicated region
    $region53: #{mlp_forward.1} parent=5 // pred_check
      _
    $region54: #{mlp_forward.1} parent=5 // pred_check_branch
      %292 = sbr.rel (%p289) target = $region56
    $region55: #{mlp_forward.1} parent=5 // pred_region
      %s293 = ssub.s32 %s15, 1
      %s294 = smul.u32 19, %s20
      %p295 = scmp.lt.s32.totalorder %s294, 37
      %s296 = scalar_select %p295, %s294, 37
      %s297 = smul.addr %s296, 4
      %s298 = scalar_lea.vmem %s0, %s297
      %p299 = pneg %p41
      %p300 = pneg %p38
      %p301 = pneg %p62
      %p302 = pneg %p59
      %p303 = pneg %p83
      %p304 = pneg %p80
      %p305 = pneg %p104
      %p306 = pneg %p101
      %p307 = pneg %p125
      %p308 = pneg %p122
      %p309 = pneg %p146
      %p310 = pneg %p143
      %p311 = pneg %p167
      %p312 = pneg %p164
      %p313 = pneg %p188
      %p314 = pneg %p185
      %p315 = pneg %p209
      %p316 = pneg %p206
      %p317 = pneg %p235
      %p318 = pneg %p232
      %s319 = smul.u32 19, %s20
      %p320 = scmp.lt.s32.totalorder %s319, 37
      %s321 = scalar_select %p320, %s319, 37
      %s322 = smul.addr %s321, 8
      %s323 = scalar_lea.vmem %s9, %s322
      %s324 = smul.u32 19, %s20
      %p325 = scmp.lt.s32.totalorder %s324, 37
      %s326 = scalar_select %p325, %s324, 37
      %s327 = smul.addr %s326, 4
      %s328 = scalar_lea.vmem %s0, %s327
      %s329 = smul.u32 19, %s20
      %s330 = smul.u32 19, %s20
      %p331 = scmp.lt.s32.totalorder %s330, 37
      %s332 = scalar_select %p331, %s330, 37
      %s333 = smul.addr %s332, 8
      %s334 = scalar_lea.vmem %s9, %s333
      %s335 = smul.u32 19, %s20
      %v336 = vld [vmem:[%s328] sm:$0xf]
      %v337 = vld [vmem:[%s328 + $0x4] sm:$0xf]
      %v338 = vld [vmem:[%s328 + $0x8] sm:$0xf]
      %v339 = vld [vmem:[%s328 + $0xc] sm:$0xf]
      %v340 = vld [vmem:[%s328 + $0x10] sm:$0xf]
      %v341 = vld [vmem:[%s328 + $0x14] sm:$0xf]
      %v342 = vld [vmem:[%s328 + $0x18] sm:$0xf]
      %v343 = vld [vmem:[%s328 + $0x1c] sm:$0xf]
      %v344 = vld [vmem:[%s328 + $0x20] sm:$0xf]
      %v345 = vld [vmem:[%s328 + $0x24] sm:$0xf]
      %v346 = vld [vmem:[%s328 + $0x28] sm:$0xf]
      %v347 = vld [vmem:[%s328 + $0x2c] sm:$0xf]
      %v348 = vld [vmem:[%s328 + $0x30] sm:$0xf]
      %v349 = vld [vmem:[%s328 + $0x34] sm:$0xf]
      %v350 = vld [vmem:[%s328 + $0x38] sm:$0xf]
      %v351 = vld [vmem:[%s328 + $0x3c] sm:$0xf]
      %v352 = vld [vmem:[%s328 + $0x40] sm:$0xf]
      %v353 = vld [vmem:[%s328 + $0x44] sm:$0xf]
      %v354 = vld [vmem:[%s328 + $0x48] sm:$0xf]
      %v355 = vld [vmem:[%s1] sm:$0xf]
      %v356 = vld [vmem:[%s1 + $0x4] sm:$0xf]
      %v357 = vld [vmem:[%s1 + $0x8] sm:$0xf]
      %v358 = vld [vmem:[%s1 + $0xc] sm:$0xf]
      %v359 = vld [vmem:[%s1 + $0x10] sm:$0xf]
      %v360 = vld [vmem:[%s1 + $0x14] sm:$0xf]
      %v361 = vld [vmem:[%s1 + $0x18] sm:$0xf]
      %v362 = vld [vmem:[%s1 + $0x1c] sm:$0xf]
      %v363 = vld [vmem:[%s1 + $0x20] sm:$0xf]
      %v364 = vld [vmem:[%s1 + $0x24] sm:$0xf]
      %v365 = vld [vmem:[%s1 + $0x28] sm:$0xf]
      %v366 = vld [vmem:[%s1 + $0x2c] sm:$0xf]
      %v367 = vld [vmem:[%s1 + $0x30] sm:$0xf]
      %v368 = vld [vmem:[%s1 + $0x34] sm:$0xf]
      %v369 = vld [vmem:[%s1 + $0x38] sm:$0xf]
      %v370 = vld [vmem:[%s1 + $0x3c] sm:$0xf]
      %v371 = vld [vmem:[%s2] sm:$0x1]
      %v373 = vperm.slane %v371, 0
      %v394 = vunpack.c.l.b16 %v336
      %v395 = vunpack.c.l.b16 %v337
      %v396 = vunpack.c.l.b16 %v338
      %v397 = vunpack.c.l.b16 %v339
      %v398 = vunpack.c.l.b16 %v340
      %v399 = vunpack.c.l.b16 %v341
      %v400 = vunpack.c.l.b16 %v342
      %v401 = vunpack.c.l.b16 %v343
      %v402 = vunpack.c.l.b16 %v344
      %v403 = vunpack.c.l.b16 %v345
      %v404 = vunpack.c.l.b16 %v346
      %v405 = vunpack.c.l.b16 %v347
      %v406 = vunpack.c.l.b16 %v348
      %v407 = vunpack.c.l.b16 %v349
      %v408 = vunpack.c.l.b16 %v350
      %v409 = vunpack.c.l.b16 %v351
      %v410 = vunpack.c.l.b16 %v352
      %v411 = vunpack.c.l.b16 %v353
      %v412 = vunpack.c.l.b16 %v354
      %v413 = vpack.c.b16 %v395, %v394
      %v414 = vpack.c.b16 %v397, %v396
      %v415 = vpack.c.b16 %v399, %v398
      %v416 = vpack.c.b16 %v401, %v400
      %v417 = vpack.c.b16 %v403, %v402
      %v418 = vpack.c.b16 %v405, %v404
      %v419 = vpack.c.b16 %v407, %v406
      %v420 = vpack.c.b16 %v409, %v408
      %v421 = vpack.c.b16 %v411, %v410
      %v422 = vpack.c.b16 %v412, %v412
      %v449 = vunpack.c.l.b16 %v355
      %v450 = vunpack.c.l.b16 %v356
      %v451 = vunpack.c.l.b16 %v357
      %v452 = vunpack.c.l.b16 %v358
      %v453 = vunpack.c.l.b16 %v359
      %v454 = vunpack.c.l.b16 %v360
      %v455 = vunpack.c.l.b16 %v361
      %v456 = vunpack.c.l.b16 %v362
      %v457 = vunpack.c.l.b16 %v363
      %v458 = vunpack.c.l.b16 %v364
      %v459 = vunpack.c.l.b16 %v365
      %v460 = vunpack.c.l.b16 %v366
      %v461 = vunpack.c.l.b16 %v367
      %v462 = vunpack.c.l.b16 %v368
      %v463 = vunpack.c.l.b16 %v369
      %v464 = vunpack.c.l.b16 %v370
      %v465 = vpack.c.b16 %v450, %v449
      %v466 = vpack.c.b16 %v452, %v451
      %v467 = vpack.c.b16 %v454, %v453
      %v468 = vpack.c.b16 %v456, %v455
      %v469 = vpack.c.b16 %v458, %v457
      %v470 = vpack.c.b16 %v460, %v459
      %v471 = vpack.c.b16 %v462, %v461
      %v472 = vpack.c.b16 %v464, %v463
      %481 = vmatpush.bf16.msra.mxu0 %v472
      %482 = vmatpush.bf16.msra.mxu0 %v471
      %483 = vmatpush.bf16.msra.mxu0 %v470
      %484 = vmatpush.bf16.msra.mxu0 %v469
      %485 = vmatpush.bf16.msra.mxu0 %v468
      %486 = vmatpush.bf16.msra.mxu0 %v467
      %487 = vmatpush.bf16.msra.mxu0 %v466
      %488 = vmatpush.bf16.msra.mxu0 %v465
      %489 = vmatmul.bf16.gmra.mxu0 %v413
      %v490 = vpop.f32.mrf.mxu0
      %v491 = vadd.f32 %v373, %v490
      %v492 = vpop.f32.mrf.mxu0
      %v493 = vadd.f32 %v373, %v492
      %494 = vmatmul.bf16.gmra.mxu0 %v414
      %v495 = vpop.f32.mrf.mxu0
      %v496 = vadd.f32 %v373, %v495
      %v497 = vpop.f32.mrf.mxu0
      %v498 = vadd.f32 %v373, %v497
      %499 = vmatmul.bf16.gmra.mxu0 %v415
      %v500 = vpop.f32.mrf.mxu0
      %v501 = vadd.f32 %v373, %v500
      %v502 = vpop.f32.mrf.mxu0
      %v503 = vadd.f32 %v373, %v502
      %504 = vmatmul.bf16.gmra.mxu0 %v416
      %v505 = vpop.f32.mrf.mxu0
      %v506 = vadd.f32 %v373, %v505
      %v507 = vpop.f32.mrf.mxu0
      %v508 = vadd.f32 %v373, %v507
      %509 = vmatmul.bf16.gmra.mxu0 %v417
      %v510 = vpop.f32.mrf.mxu0
      %v511 = vadd.f32 %v373, %v510
      %v512 = vpop.f32.mrf.mxu0
      %v513 = vadd.f32 %v373, %v512
      %514 = vmatmul.bf16.gmra.mxu0 %v418
      %v515 = vpop.f32.mrf.mxu0
      %v516 = vadd.f32 %v373, %v515
      %v517 = vpop.f32.mrf.mxu0
      %v518 = vadd.f32 %v373, %v517
      %519 = vmatmul.bf16.gmra.mxu0 %v419
      %v520 = vpop.f32.mrf.mxu0
      %v521 = vadd.f32 %v373, %v520
      %v522 = vpop.f32.mrf.mxu0
      %v523 = vadd.f32 %v373, %v522
      %524 = vmatmul.bf16.gmra.mxu0 %v420
      %v525 = vpop.f32.mrf.mxu0
      %v526 = vadd.f32 %v373, %v525
      %v527 = vpop.f32.mrf.mxu0
      %v528 = vadd.f32 %v373, %v527
      %529 = vmatmul.bf16.gmra.mxu0 %v421
      %v530 = vpop.f32.mrf.mxu0
      %v531 = vadd.f32 %v373, %v530
      %v532 = vpop.f32.mrf.mxu0
      %v533 = vadd.f32 %v373, %v532
      %534 = vmatmul.bf16.gmra.mxu0 %v422
      %v535 = vpop.f32.mrf.mxu0
      %v536 = vadd.f32 %v373, %v535
      %v537 = vpop.f32.mrf.mxu0
      %538 = vdwg.mxu0
      %v539 = vtanh.pop %v491
      %v540 = vtanh.pop %v493
      %v541 = vtanh.pop %v496
      %v542 = vtanh.pop %v498
      %v543 = vtanh.pop %v501
      %v544 = vtanh.pop %v503
      %v545 = vtanh.pop %v506
      %v546 = vtanh.pop %v508
      %v547 = vtanh.pop %v511
      %v548 = vtanh.pop %v513
      %v549 = vtanh.pop %v516
      %v550 = vtanh.pop %v518
      %v551 = vtanh.pop %v521
      %v552 = vtanh.pop %v523
      %v553 = vtanh.pop %v526
      %v554 = vtanh.pop %v528
      %v555 = vtanh.pop %v531
      %v556 = vtanh.pop %v533
      %v557 = vtanh.pop %v536
      %v558 = vld [vmem:[%s3] sm:$0xf]
      %v559 = vld [vmem:[%s3 + $0x4] sm:$0xf]
      %v560 = vld [vmem:[%s3 + $0x8] sm:$0xf]
      %v561 = vld [vmem:[%s3 + $0xc] sm:$0xf]
      %v562 = vld [vmem:[%s3 + $0x10] sm:$0xf]
      %v563 = vld [vmem:[%s3 + $0x14] sm:$0xf]
      %v564 = vld [vmem:[%s3 + $0x18] sm:$0xf]
      %v565 = vld [vmem:[%s3 + $0x1c] sm:$0xf]
      %v566 = vld [vmem:[%s3 + $0x20] sm:$0xf]
      %v567 = vld [vmem:[%s3 + $0x24] sm:$0xf]
      %v568 = vld [vmem:[%s3 + $0x28] sm:$0xf]
      %v569 = vld [vmem:[%s3 + $0x2c] sm:$0xf]
      %v570 = vld [vmem:[%s3 + $0x30] sm:$0xf]
      %v571 = vld [vmem:[%s3 + $0x34] sm:$0xf]
      %v572 = vld [vmem:[%s3 + $0x38] sm:$0xf]
      %v573 = vld [vmem:[%s3 + $0x3c] sm:$0xf]
      %v574 = vld [vmem:[%s4] sm:$0x1]
      %v575 = vpack.c.bf16 %v540, %v539
      %v576 = vpack.c.bf16 %v542, %v541
      %v577 = vpack.c.bf16 %v544, %v543
      %v578 = vpack.c.bf16 %v546, %v545
      %v579 = vpack.c.bf16 %v548, %v547
      %v580 = vpack.c.bf16 %v550, %v549
      %v581 = vpack.c.bf16 %v552, %v551
      %v582 = vpack.c.bf16 %v554, %v553
      %v583 = vpack.c.bf16 %v556, %v555
      %v584 = vpack.c.bf16 %v557, %v557
      %v586 = vperm.slane %v574, 0
      %v604 = vunpack.c.l.b16 %v558
      %v605 = vunpack.c.l.b16 %v559
      %v606 = vunpack.c.l.b16 %v560
      %v607 = vunpack.c.l.b16 %v561
      %v608 = vunpack.c.l.b16 %v562
      %v609 = vunpack.c.l.b16 %v563
      %v610 = vunpack.c.l.b16 %v564
      %v611 = vunpack.c.l.b16 %v565
      %v612 = vunpack.c.l.b16 %v566
      %v613 = vunpack.c.l.b16 %v567
      %v614 = vunpack.c.l.b16 %v568
      %v615 = vunpack.c.l.b16 %v569
      %v616 = vunpack.c.l.b16 %v570
      %v617 = vunpack.c.l.b16 %v571
      %v618 = vunpack.c.l.b16 %v572
      %v619 = vunpack.c.l.b16 %v573
      %v620 = vpack.c.b16 %v605, %v604
      %v621 = vpack.c.b16 %v607, %v606
      %v622 = vpack.c.b16 %v609, %v608
      %v623 = vpack.c.b16 %v611, %v610
      %v624 = vpack.c.b16 %v613, %v612
      %v625 = vpack.c.b16 %v615, %v614
      %v626 = vpack.c.b16 %v617, %v616
      %v627 = vpack.c.b16 %v619, %v618
      %636 = vmatpush.bf16.msra.mxu0 %v627
      %637 = vmatpush.bf16.msra.mxu0 %v626
      %638 = vmatpush.bf16.msra.mxu0 %v625
      %639 = vmatpush.bf16.msra.mxu0 %v624
      %640 = vmatpush.bf16.msra.mxu0 %v623
      %641 = vmatpush.bf16.msra.mxu0 %v622
      %642 = vmatpush.bf16.msra.mxu0 %v621
      %643 = vmatpush.bf16.msra.mxu0 %v620
      %644 = vmatmul.bf16.gmra.mxu0 %v575
      %v645 = vpop.f32.mrf.mxu0
      %v646 = vadd.f32 %v586, %v645
      %v647 = vpop.f32.mrf.mxu0
      %v648 = vadd.f32 %v586, %v647
      %649 = vmatmul.bf16.gmra.mxu0 %v576
      %v650 = vpop.f32.mrf.mxu0
      %v651 = vadd.f32 %v586, %v650
      %v652 = vpop.f32.mrf.mxu0
      %v653 = vadd.f32 %v586, %v652
      %654 = vmatmul.bf16.gmra.mxu0 %v577
      %v655 = vpop.f32.mrf.mxu0
      %v656 = vadd.f32 %v586, %v655
      %v657 = vpop.f32.mrf.mxu0
      %v658 = vadd.f32 %v586, %v657
      %659 = vmatmul.bf16.gmra.mxu0 %v578
      %v660 = vpop.f32.mrf.mxu0
      %v661 = vadd.f32 %v586, %v660
      %v662 = vpop.f32.mrf.mxu0
      %v663 = vadd.f32 %v586, %v662
      %664 = vmatmul.bf16.gmra.mxu0 %v579
      %v665 = vpop.f32.mrf.mxu0
      %v666 = vadd.f32 %v586, %v665
      %v667 = vpop.f32.mrf.mxu0
      %v668 = vadd.f32 %v586, %v667
      %669 = vmatmul.bf16.gmra.mxu0 %v580
      %v670 = vpop.f32.mrf.mxu0
      %v671 = vadd.f32 %v586, %v670
      %v672 = vpop.f32.mrf.mxu0
      %v673 = vadd.f32 %v586, %v672
      %674 = vmatmul.bf16.gmra.mxu0 %v581
      %v675 = vpop.f32.mrf.mxu0
      %v676 = vadd.f32 %v586, %v675
      %v677 = vpop.f32.mrf.mxu0
      %v678 = vadd.f32 %v586, %v677
      %679 = vmatmul.bf16.gmra.mxu0 %v582
      %v680 = vpop.f32.mrf.mxu0
      %v681 = vadd.f32 %v586, %v680
      %v682 = vpop.f32.mrf.mxu0
      %v683 = vadd.f32 %v586, %v682
      %684 = vmatmul.bf16.gmra.mxu0 %v583
      %v685 = vpop.f32.mrf.mxu0
      %v686 = vadd.f32 %v586, %v685
      %v687 = vpop.f32.mrf.mxu0
      %v688 = vadd.f32 %v586, %v687
      %689 = vmatmul.bf16.gmra.mxu0 %v584
      %v690 = vpop.f32.mrf.mxu0
      %v691 = vadd.f32 %v586, %v690
      %v692 = vpop.f32.mrf.mxu0
      %693 = vdwg.mxu0
      %v694 = vtanh.pop %v646
      %v695 = vtanh.pop %v648
      %v696 = vtanh.pop %v651
      %v697 = vtanh.pop %v653
      %v698 = vtanh.pop %v656
      %v699 = vtanh.pop %v658
      %v700 = vtanh.pop %v661
      %v701 = vtanh.pop %v663
      %v702 = vtanh.pop %v666
      %v703 = vtanh.pop %v668
      %v704 = vtanh.pop %v671
      %v705 = vtanh.pop %v673
      %v706 = vtanh.pop %v676
      %v707 = vtanh.pop %v678
      %v708 = vtanh.pop %v681
      %v709 = vtanh.pop %v683
      %v710 = vtanh.pop %v686
      %v711 = vtanh.pop %v688
      %v712 = vtanh.pop %v691
      %v713 = vld [vmem:[%s5] sm:$0xf]
      %v714 = vld [vmem:[%s5 + $0x4] sm:$0xf]
      %v715 = vld [vmem:[%s5 + $0x8] sm:$0xf]
      %v716 = vld [vmem:[%s5 + $0xc] sm:$0xf]
      %v717 = vld [vmem:[%s5 + $0x10] sm:$0xf]
      %v718 = vld [vmem:[%s5 + $0x14] sm:$0xf]
      %v719 = vld [vmem:[%s5 + $0x18] sm:$0xf]
      %v720 = vld [vmem:[%s5 + $0x1c] sm:$0xf]
      %v721 = vld [vmem:[%s5 + $0x20] sm:$0xf]
      %v722 = vld [vmem:[%s5 + $0x24] sm:$0xf]
      %v723 = vld [vmem:[%s5 + $0x28] sm:$0xf]
      %v724 = vld [vmem:[%s5 + $0x2c] sm:$0xf]
      %v725 = vld [vmem:[%s5 + $0x30] sm:$0xf]
      %v726 = vld [vmem:[%s5 + $0x34] sm:$0xf]
      %v727 = vld [vmem:[%s5 + $0x38] sm:$0xf]
      %v728 = vld [vmem:[%s5 + $0x3c] sm:$0xf]
      %v729 = vld [vmem:[%s6] sm:$0x1]
      %v730 = vpack.c.bf16 %v695, %v694
      %v731 = vpack.c.bf16 %v697, %v696
      %v732 = vpack.c.bf16 %v699, %v698
      %v733 = vpack.c.bf16 %v701, %v700
      %v734 = vpack.c.bf16 %v703, %v702
      %v735 = vpack.c.bf16 %v705, %v704
      %v736 = vpack.c.bf16 %v707, %v706
      %v737 = vpack.c.bf16 %v709, %v708
      %v738 = vpack.c.bf16 %v711, %v710
      %v739 = vpack.c.bf16 %v712, %v712
      %v741 = vperm.slane %v729, 0
      %v759 = vunpack.c.l.b16 %v713
      %v760 = vunpack.c.l.b16 %v714
      %v761 = vunpack.c.l.b16 %v715
      %v762 = vunpack.c.l.b16 %v716
      %v763 = vunpack.c.l.b16 %v717
      %v764 = vunpack.c.l.b16 %v718
      %v765 = vunpack.c.l.b16 %v719
      %v766 = vunpack.c.l.b16 %v720
      %v767 = vunpack.c.l.b16 %v721
      %v768 = vunpack.c.l.b16 %v722
      %v769 = vunpack.c.l.b16 %v723
      %v770 = vunpack.c.l.b16 %v724
      %v771 = vunpack.c.l.b16 %v725
      %v772 = vunpack.c.l.b16 %v726
      %v773 = vunpack.c.l.b16 %v727
      %v774 = vunpack.c.l.b16 %v728
      %v775 = vpack.c.b16 %v760, %v759
      %v776 = vpack.c.b16 %v762, %v761
      %v777 = vpack.c.b16 %v764, %v763
      %v778 = vpack.c.b16 %v766, %v765
      %v779 = vpack.c.b16 %v768, %v767
      %v780 = vpack.c.b16 %v770, %v769
      %v781 = vpack.c.b16 %v772, %v771
      %v782 = vpack.c.b16 %v774, %v773
      %791 = vmatpush.bf16.msra.mxu0 %v782
      %792 = vmatpush.bf16.msra.mxu0 %v781
      %793 = vmatpush.bf16.msra.mxu0 %v780
      %794 = vmatpush.bf16.msra.mxu0 %v779
      %795 = vmatpush.bf16.msra.mxu0 %v778
      %796 = vmatpush.bf16.msra.mxu0 %v777
      %797 = vmatpush.bf16.msra.mxu0 %v776
      %798 = vmatpush.bf16.msra.mxu0 %v775
      %799 = vmatmul.bf16.gmra.mxu0 %v730
      %v800 = vpop.f32.mrf.mxu0
      %v801 = vadd.f32 %v741, %v800
      %v802 = vpop.f32.mrf.mxu0
      %v803 = vadd.f32 %v741, %v802
      %804 = vmatmul.bf16.gmra.mxu0 %v731
      %v805 = vpop.f32.mrf.mxu0
      %v806 = vadd.f32 %v741, %v805
      %v807 = vpop.f32.mrf.mxu0
      %v808 = vadd.f32 %v741, %v807
      %809 = vmatmul.bf16.gmra.mxu0 %v732
      %v810 = vpop.f32.mrf.mxu0
      %v811 = vadd.f32 %v741, %v810
      %v812 = vpop.f32.mrf.mxu0
      %v813 = vadd.f32 %v741, %v812
      %814 = vmatmul.bf16.gmra.mxu0 %v733
      %v815 = vpop.f32.mrf.mxu0
      %v816 = vadd.f32 %v741, %v815
      %v817 = vpop.f32.mrf.mxu0
      %v818 = vadd.f32 %v741, %v817
      %819 = vmatmul.bf16.gmra.mxu0 %v734
      %v820 = vpop.f32.mrf.mxu0
      %v821 = vadd.f32 %v741, %v820
      %v822 = vpop.f32.mrf.mxu0
      %v823 = vadd.f32 %v741, %v822
      %824 = vmatmul.bf16.gmra.mxu0 %v735
      %v825 = vpop.f32.mrf.mxu0
      %v826 = vadd.f32 %v741, %v825
      %v827 = vpop.f32.mrf.mxu0
      %v828 = vadd.f32 %v741, %v827
      %829 = vmatmul.bf16.gmra.mxu0 %v736
      %v830 = vpop.f32.mrf.mxu0
      %v831 = vadd.f32 %v741, %v830
      %v832 = vpop.f32.mrf.mxu0
      %v833 = vadd.f32 %v741, %v832
      %834 = vmatmul.bf16.gmra.mxu0 %v737
      %v835 = vpop.f32.mrf.mxu0
      %v836 = vadd.f32 %v741, %v835
      %v837 = vpop.f32.mrf.mxu0
      %v838 = vadd.f32 %v741, %v837
      %839 = vmatmul.bf16.gmra.mxu0 %v738
      %v840 = vpop.f32.mrf.mxu0
      %v841 = vadd.f32 %v741, %v840
      %v842 = vpop.f32.mrf.mxu0
      %v843 = vadd.f32 %v741, %v842
      %844 = vmatmul.bf16.gmra.mxu0 %v739
      %v845 = vpop.f32.mrf.mxu0
      %v846 = vadd.f32 %v741, %v845
      %v847 = vpop.f32.mrf.mxu0
      %848 = vdwg.mxu0
      %v849 = vtanh.pop %v801
      %v850 = vtanh.pop %v803
      %v851 = vtanh.pop %v806
      %v852 = vtanh.pop %v808
      %v853 = vtanh.pop %v811
      %v854 = vtanh.pop %v813
      %v855 = vtanh.pop %v816
      %v856 = vtanh.pop %v818
      %v857 = vtanh.pop %v821
      %v858 = vtanh.pop %v823
      %v859 = vtanh.pop %v826
      %v860 = vtanh.pop %v828
      %v861 = vtanh.pop %v831
      %v862 = vtanh.pop %v833
      %v863 = vtanh.pop %v836
      %v864 = vtanh.pop %v838
      %v865 = vtanh.pop %v841
      %v866 = vtanh.pop %v843
      %v867 = vtanh.pop %v846
      %v868 = vld [vmem:[%s7] sm:$0xf]
      %v869 = vld [vmem:[%s7 + $0x4] sm:$0xf]
      %v870 = vld [vmem:[%s7 + $0x8] sm:$0xf]
      %v871 = vld [vmem:[%s7 + $0xc] sm:$0xf]
      %v872 = vld [vmem:[%s7 + $0x10] sm:$0xf]
      %v873 = vld [vmem:[%s7 + $0x14] sm:$0xf]
      %v874 = vld [vmem:[%s7 + $0x18] sm:$0xf]
      %v875 = vld [vmem:[%s7 + $0x1c] sm:$0xf]
      %v876 = vld [vmem:[%s7 + $0x20] sm:$0xf]
      %v877 = vld [vmem:[%s7 + $0x24] sm:$0xf]
      %v878 = vld [vmem:[%s7 + $0x28] sm:$0xf]
      %v879 = vld [vmem:[%s7 + $0x2c] sm:$0xf]
      %v880 = vld [vmem:[%s7 + $0x30] sm:$0xf]
      %v881 = vld [vmem:[%s7 + $0x34] sm:$0xf]
      %v882 = vld [vmem:[%s7 + $0x38] sm:$0xf]
      %v883 = vld [vmem:[%s7 + $0x3c] sm:$0xf]
      %v884 = vld [vmem:[%s8] sm:$0x1]
      %v885 = vpack.c.bf16 %v850, %v849
      %v886 = vpack.c.bf16 %v852, %v851
      %v887 = vpack.c.bf16 %v854, %v853
      %v888 = vpack.c.bf16 %v856, %v855
      %v889 = vpack.c.bf16 %v858, %v857
      %v890 = vpack.c.bf16 %v860, %v859
      %v891 = vpack.c.bf16 %v862, %v861
      %v892 = vpack.c.bf16 %v864, %v863
      %v893 = vpack.c.bf16 %v866, %v865
      %v894 = vpack.c.bf16 %v867, %v867
      %v896 = vperm.slane %v884, 0
      %v914 = vunpack.c.l.b16 %v868
      %v915 = vunpack.c.l.b16 %v869
      %v916 = vunpack.c.l.b16 %v870
      %v917 = vunpack.c.l.b16 %v871
      %v918 = vunpack.c.l.b16 %v872
      %v919 = vunpack.c.l.b16 %v873
      %v920 = vunpack.c.l.b16 %v874
      %v921 = vunpack.c.l.b16 %v875
      %v922 = vunpack.c.l.b16 %v876
      %v923 = vunpack.c.l.b16 %v877
      %v924 = vunpack.c.l.b16 %v878
      %v925 = vunpack.c.l.b16 %v879
      %v926 = vunpack.c.l.b16 %v880
      %v927 = vunpack.c.l.b16 %v881
      %v928 = vunpack.c.l.b16 %v882
      %v929 = vunpack.c.l.b16 %v883
      %v930 = vpack.c.b16 %v915, %v914
      %v931 = vpack.c.b16 %v917, %v916
      %v932 = vpack.c.b16 %v919, %v918
      %v933 = vpack.c.b16 %v921, %v920
      %v934 = vpack.c.b16 %v923, %v922
      %v935 = vpack.c.b16 %v925, %v924
      %v936 = vpack.c.b16 %v927, %v926
      %v937 = vpack.c.b16 %v929, %v928
      %946 = vmatpush.bf16.msra.mxu0 %v937
      %947 = vmatpush.bf16.msra.mxu0 %v936
      %948 = vmatpush.bf16.msra.mxu0 %v935
      %949 = vmatpush.bf16.msra.mxu0 %v934
      %950 = vmatpush.bf16.msra.mxu0 %v933
      %951 = vmatpush.bf16.msra.mxu0 %v932
      %952 = vmatpush.bf16.msra.mxu0 %v931
      %953 = vmatpush.bf16.msra.mxu0 %v930
      %954 = vmatmul.bf16.gmra.mxu0 %v885
      %v955 = vpop.f32.mrf.mxu0
      %v956 = vadd.f32 %v896, %v955
      %v957 = vpop.f32.mrf.mxu0
      %v958 = vadd.f32 %v896, %v957
      %959 = vmatmul.bf16.gmra.mxu0 %v886
      %v960 = vpop.f32.mrf.mxu0
      %v961 = vadd.f32 %v896, %v960
      %v962 = vpop.f32.mrf.mxu0
      %v963 = vadd.f32 %v896, %v962
      %964 = vmatmul.bf16.gmra.mxu0 %v887
      %v965 = vpop.f32.mrf.mxu0
      %v966 = vadd.f32 %v896, %v965
      %v967 = vpop.f32.mrf.mxu0
      %v968 = vadd.f32 %v896, %v967
      %969 = vmatmul.bf16.gmra.mxu0 %v888
      %v970 = vpop.f32.mrf.mxu0
      %v971 = vadd.f32 %v896, %v970
      %v972 = vpop.f32.mrf.mxu0
      %v973 = vadd.f32 %v896, %v972
      %974 = vmatmul.bf16.gmra.mxu0 %v889
      %v975 = vpop.f32.mrf.mxu0
      %v976 = vadd.f32 %v896, %v975
      %v977 = vpop.f32.mrf.mxu0
      %v978 = vadd.f32 %v896, %v977
      %979 = vmatmul.bf16.gmra.mxu0 %v890
      %v980 = vpop.f32.mrf.mxu0
      %v981 = vadd.f32 %v896, %v980
      %v982 = vpop.f32.mrf.mxu0
      %v983 = vadd.f32 %v896, %v982
      %984 = vmatmul.bf16.gmra.mxu0 %v891
      %v985 = vpop.f32.mrf.mxu0
      %v986 = vadd.f32 %v896, %v985
      %v987 = vpop.f32.mrf.mxu0
      %v988 = vadd.f32 %v896, %v987
      %989 = vmatmul.bf16.gmra.mxu0 %v892
      %v990 = vpop.f32.mrf.mxu0
      %v991 = vadd.f32 %v896, %v990
      %v992 = vpop.f32.mrf.mxu0
      %v993 = vadd.f32 %v896, %v992
      %994 = vmatmul.bf16.gmra.mxu0 %v893
      %v995 = vpop.f32.mrf.mxu0
      %v996 = vadd.f32 %v896, %v995
      %v997 = vpop.f32.mrf.mxu0
      %v998 = vadd.f32 %v896, %v997
      %999 = vmatmul.bf16.gmra.mxu0 %v894
      %v1000 = vpop.f32.mrf.mxu0
      %v1001 = vadd.f32 %v896, %v1000
      %v1002 = vpop.f32.mrf.mxu0
      %1003 = vdwg.mxu0
      %v1004 = vxor.u32 %v956, 2147483648
      %v1005 = vxor.u32 %v958, 2147483648
      %v1006 = vxor.u32 %v961, 2147483648
      %v1007 = vxor.u32 %v963, 2147483648
      %v1008 = vxor.u32 %v966, 2147483648
      %v1009 = vxor.u32 %v968, 2147483648
      %v1010 = vxor.u32 %v971, 2147483648
      %v1011 = vxor.u32 %v973, 2147483648
      %v1012 = vxor.u32 %v976, 2147483648
      %v1013 = vxor.u32 %v978, 2147483648
      %v1014 = vxor.u32 %v981, 2147483648
      %v1015 = vxor.u32 %v983, 2147483648
      %v1016 = vxor.u32 %v986, 2147483648
      %v1017 = vxor.u32 %v988, 2147483648
      %v1018 = vxor.u32 %v991, 2147483648
      %v1019 = vxor.u32 %v993, 2147483648
      %v1020 = vxor.u32 %v996, 2147483648
      %v1021 = vxor.u32 %v998, 2147483648
      %v1022 = vxor.u32 %v1001, 2147483648
      %v1023 = vmul.f32 %v1004, 1.442695
      %v1024 = vpow.pop %v1023
      %v1025 = vmul.f32 %v1005, 1.442695
      %v1026 = vpow.pop %v1025
      %v1027 = vmul.f32 %v1006, 1.442695
      %v1028 = vpow.pop %v1027
      %v1029 = vmul.f32 %v1007, 1.442695
      %v1030 = vpow.pop %v1029
      %v1031 = vmul.f32 %v1008, 1.442695
      %v1032 = vpow.pop %v1031
      %v1033 = vmul.f32 %v1009, 1.442695
      %v1034 = vpow.pop %v1033
      %v1035 = vmul.f32 %v1010, 1.442695
      %v1036 = vpow.pop %v1035
      %v1037 = vmul.f32 %v1011, 1.442695
      %v1038 = vpow.pop %v1037
      %v1039 = vmul.f32 %v1012, 1.442695
      %v1040 = vpow.pop %v1039
      %v1041 = vmul.f32 %v1013, 1.442695
      %v1042 = vpow.pop %v1041
      %v1043 = vmul.f32 %v1014, 1.442695
      %v1044 = vpow.pop %v1043
      %v1045 = vmul.f32 %v1015, 1.442695
      %v1046 = vpow.pop %v1045
      %v1047 = vmul.f32 %v1016, 1.442695
      %v1048 = vpow.pop %v1047
      %v1049 = vmul.f32 %v1017, 1.442695
      %v1050 = vpow.pop %v1049
      %v1051 = vmul.f32 %v1018, 1.442695
      %v1052 = vpow.pop %v1051
      %v1053 = vmul.f32 %v1019, 1.442695
      %v1054 = vpow.pop %v1053
      %v1055 = vmul.f32 %v1020, 1.442695
      %v1056 = vpow.pop %v1055
      %v1057 = vmul.f32 %v1021, 1.442695
      %v1058 = vpow.pop %v1057
      %v1059 = vmul.f32 %v1022, 1.442695
      %v1060 = vpow.pop %v1059
      %v1061 = vadd.f32 %v1024, 1.0
      %v1062 = vadd.f32 %v1026, 1.0
      %v1063 = vadd.f32 %v1028, 1.0
      %v1064 = vadd.f32 %v1030, 1.0
      %v1065 = vadd.f32 %v1032, 1.0
      %v1066 = vadd.f32 %v1034, 1.0
      %v1067 = vadd.f32 %v1036, 1.0
      %v1068 = vadd.f32 %v1038, 1.0
      %v1069 = vadd.f32 %v1040, 1.0
      %v1070 = vadd.f32 %v1042, 1.0
      %v1071 = vadd.f32 %v1044, 1.0
      %v1072 = vadd.f32 %v1046, 1.0
      %v1073 = vadd.f32 %v1048, 1.0
      %v1074 = vadd.f32 %v1050, 1.0
      %v1075 = vadd.f32 %v1052, 1.0
      %v1076 = vadd.f32 %v1054, 1.0
      %v1077 = vadd.f32 %v1056, 1.0
      %v1078 = vadd.f32 %v1058, 1.0
      %v1079 = vadd.f32 %v1060, 1.0
      %v1080 = vrcp.pop %v1061
      %v1081 = vmul.f32 %v1061, %v1080
      %v1082 = vsub.f32 1.0, %v1081
      %v1083 = vmul.f32 %v1080, %v1082
      %v1084 = vadd.f32 %v1080, %v1083
      %vm1085 = vweird.f32 %v1061
      %vm1086 = vweird.f32 %v1080
      %vm1087 = vmor %vm1085, %vm1086
      %v1088 = vsel %vm1087, %v1080, %v1084
      %v1089 = vand.u32 2147483647, %v1061
      %vm1090 = vcmp.eq.f32.partialorder %v1089, 8.507059e+37
      %v1091 = vand.u32 %v1061, 2147483648
      %v1092 = vor.u32 1.1754944e-38, %v1091
      %v1093 = vsel %vm1090, %v1092, %v1088
      %v1094 = vmul.f32 1.0, %v1093
      %v1095 = vrcp.pop %v1062
      %v1096 = vmul.f32 %v1062, %v1095
      %v1097 = vsub.f32 1.0, %v1096
      %v1098 = vmul.f32 %v1095, %v1097
      %v1099 = vadd.f32 %v1095, %v1098
      %vm1100 = vweird.f32 %v1062
      %vm1101 = vweird.f32 %v1095
      %vm1102 = vmor %vm1100, %vm1101
      %v1103 = vsel %vm1102, %v1095, %v1099
      %v1104 = vand.u32 2147483647, %v1062
      %vm1105 = vcmp.eq.f32.partialorder %v1104, 8.507059e+37
      %v1106 = vand.u32 %v1062, 2147483648
      %v1107 = vor.u32 1.1754944e-38, %v1106
      %v1108 = vsel %vm1105, %v1107, %v1103
      %v1109 = vmul.f32 1.0, %v1108
      %v1110 = vrcp.pop %v1063
      %v1111 = vmul.f32 %v1063, %v1110
      %v1112 = vsub.f32 1.0, %v1111
      %v1113 = vmul.f32 %v1110, %v1112
      %v1114 = vadd.f32 %v1110, %v1113
      %vm1115 = vweird.f32 %v1063
      %vm1116 = vweird.f32 %v1110
      %vm1117 = vmor %vm1115, %vm1116
      %v1118 = vsel %vm1117, %v1110, %v1114
      %v1119 = vand.u32 2147483647, %v1063
      %vm1120 = vcmp.eq.f32.partialorder %v1119, 8.507059e+37
      %v1121 = vand.u32 %v1063, 2147483648
      %v1122 = vor.u32 1.1754944e-38, %v1121
      %v1123 = vsel %vm1120, %v1122, %v1118
      %v1124 = vmul.f32 1.0, %v1123
      %v1125 = vrcp.pop %v1064
      %v1126 = vmul.f32 %v1064, %v1125
      %v1127 = vsub.f32 1.0, %v1126
      %v1128 = vmul.f32 %v1125, %v1127
      %v1129 = vadd.f32 %v1125, %v1128
      %vm1130 = vweird.f32 %v1064
      %vm1131 = vweird.f32 %v1125
      %vm1132 = vmor %vm1130, %vm1131
      %v1133 = vsel %vm1132, %v1125, %v1129
      %v1134 = vand.u32 2147483647, %v1064
      %vm1135 = vcmp.eq.f32.partialorder %v1134, 8.507059e+37
      %v1136 = vand.u32 %v1064, 2147483648
      %v1137 = vor.u32 1.1754944e-38, %v1136
      %v1138 = vsel %vm1135, %v1137, %v1133
      %v1139 = vmul.f32 1.0, %v1138
      %v1140 = vrcp.pop %v1065
      %v1141 = vmul.f32 %v1065, %v1140
      %v1142 = vsub.f32 1.0, %v1141
      %v1143 = vmul.f32 %v1140, %v1142
      %v1144 = vadd.f32 %v1140, %v1143
      %vm1145 = vweird.f32 %v1065
      %vm1146 = vweird.f32 %v1140
      %vm1147 = vmor %vm1145, %vm1146
      %v1148 = vsel %vm1147, %v1140, %v1144
      %v1149 = vand.u32 2147483647, %v1065
      %vm1150 = vcmp.eq.f32.partialorder %v1149, 8.507059e+37
      %v1151 = vand.u32 %v1065, 2147483648
      %v1152 = vor.u32 1.1754944e-38, %v1151
      %v1153 = vsel %vm1150, %v1152, %v1148
      %v1154 = vmul.f32 1.0, %v1153
      %v1155 = vrcp.pop %v1066
      %v1156 = vmul.f32 %v1066, %v1155
      %v1157 = vsub.f32 1.0, %v1156
      %v1158 = vmul.f32 %v1155, %v1157
      %v1159 = vadd.f32 %v1155, %v1158
      %vm1160 = vweird.f32 %v1066
      %vm1161 = vweird.f32 %v1155
      %vm1162 = vmor %vm1160, %vm1161
      %v1163 = vsel %vm1162, %v1155, %v1159
      %v1164 = vand.u32 2147483647, %v1066
      %vm1165 = vcmp.eq.f32.partialorder %v1164, 8.507059e+37
      %v1166 = vand.u32 %v1066, 2147483648
      %v1167 = vor.u32 1.1754944e-38, %v1166
      %v1168 = vsel %vm1165, %v1167, %v1163
      %v1169 = vmul.f32 1.0, %v1168
      %v1170 = vrcp.pop %v1067
      %v1171 = vmul.f32 %v1067, %v1170
      %v1172 = vsub.f32 1.0, %v1171
      %v1173 = vmul.f32 %v1170, %v1172
      %v1174 = vadd.f32 %v1170, %v1173
      %vm1175 = vweird.f32 %v1067
      %vm1176 = vweird.f32 %v1170
      %vm1177 = vmor %vm1175, %vm1176
      %v1178 = vsel %vm1177, %v1170, %v1174
      %v1179 = vand.u32 2147483647, %v1067
      %vm1180 = vcmp.eq.f32.partialorder %v1179, 8.507059e+37
      %v1181 = vand.u32 %v1067, 2147483648
      %v1182 = vor.u32 1.1754944e-38, %v1181
      %v1183 = vsel %vm1180, %v1182, %v1178
      %v1184 = vmul.f32 1.0, %v1183
      %v1185 = vrcp.pop %v1068
      %v1186 = vmul.f32 %v1068, %v1185
      %v1187 = vsub.f32 1.0, %v1186
      %v1188 = vmul.f32 %v1185, %v1187
      %v1189 = vadd.f32 %v1185, %v1188
      %vm1190 = vweird.f32 %v1068
      %vm1191 = vweird.f32 %v1185
      %vm1192 = vmor %vm1190, %vm1191
      %v1193 = vsel %vm1192, %v1185, %v1189
      %v1194 = vand.u32 2147483647, %v1068
      %vm1195 = vcmp.eq.f32.partialorder %v1194, 8.507059e+37
      %v1196 = vand.u32 %v1068, 2147483648
      %v1197 = vor.u32 1.1754944e-38, %v1196
      %v1198 = vsel %vm1195, %v1197, %v1193
      %v1199 = vmul.f32 1.0, %v1198
      %v1200 = vrcp.pop %v1069
      %v1201 = vmul.f32 %v1069, %v1200
      %v1202 = vsub.f32 1.0, %v1201
      %v1203 = vmul.f32 %v1200, %v1202
      %v1204 = vadd.f32 %v1200, %v1203
      %vm1205 = vweird.f32 %v1069
      %vm1206 = vweird.f32 %v1200
      %vm1207 = vmor %vm1205, %vm1206
      %v1208 = vsel %vm1207, %v1200, %v1204
      %v1209 = vand.u32 2147483647, %v1069
      %vm1210 = vcmp.eq.f32.partialorder %v1209, 8.507059e+37
      %v1211 = vand.u32 %v1069, 2147483648
      %v1212 = vor.u32 1.1754944e-38, %v1211
      %v1213 = vsel %vm1210, %v1212, %v1208
      %v1214 = vmul.f32 1.0, %v1213
      %v1215 = vrcp.pop %v1070
      %v1216 = vmul.f32 %v1070, %v1215
      %v1217 = vsub.f32 1.0, %v1216
      %v1218 = vmul.f32 %v1215, %v1217
      %v1219 = vadd.f32 %v1215, %v1218
      %vm1220 = vweird.f32 %v1070
      %vm1221 = vweird.f32 %v1215
      %vm1222 = vmor %vm1220, %vm1221
      %v1223 = vsel %vm1222, %v1215, %v1219
      %v1224 = vand.u32 2147483647, %v1070
      %vm1225 = vcmp.eq.f32.partialorder %v1224, 8.507059e+37
      %v1226 = vand.u32 %v1070, 2147483648
      %v1227 = vor.u32 1.1754944e-38, %v1226
      %v1228 = vsel %vm1225, %v1227, %v1223
      %v1229 = vmul.f32 1.0, %v1228
      %v1230 = vrcp.pop %v1071
      %v1231 = vmul.f32 %v1071, %v1230
      %v1232 = vsub.f32 1.0, %v1231
      %v1233 = vmul.f32 %v1230, %v1232
      %v1234 = vadd.f32 %v1230, %v1233
      %vm1235 = vweird.f32 %v1071
      %vm1236 = vweird.f32 %v1230
      %vm1237 = vmor %vm1235, %vm1236
      %v1238 = vsel %vm1237, %v1230, %v1234
      %v1239 = vand.u32 2147483647, %v1071
      %vm1240 = vcmp.eq.f32.partialorder %v1239, 8.507059e+37
      %v1241 = vand.u32 %v1071, 2147483648
      %v1242 = vor.u32 1.1754944e-38, %v1241
      %v1243 = vsel %vm1240, %v1242, %v1238
      %v1244 = vmul.f32 1.0, %v1243
      %v1245 = vrcp.pop %v1072
      %v1246 = vmul.f32 %v1072, %v1245
      %v1247 = vsub.f32 1.0, %v1246
      %v1248 = vmul.f32 %v1245, %v1247
      %v1249 = vadd.f32 %v1245, %v1248
      %vm1250 = vweird.f32 %v1072
      %vm1251 = vweird.f32 %v1245
      %vm1252 = vmor %vm1250, %vm1251
      %v1253 = vsel %vm1252, %v1245, %v1249
      %v1254 = vand.u32 2147483647, %v1072
      %vm1255 = vcmp.eq.f32.partialorder %v1254, 8.507059e+37
      %v1256 = vand.u32 %v1072, 2147483648
      %v1257 = vor.u32 1.1754944e-38, %v1256
      %v1258 = vsel %vm1255, %v1257, %v1253
      %v1259 = vmul.f32 1.0, %v1258
      %v1260 = vrcp.pop %v1073
      %v1261 = vmul.f32 %v1073, %v1260
      %v1262 = vsub.f32 1.0, %v1261
      %v1263 = vmul.f32 %v1260, %v1262
      %v1264 = vadd.f32 %v1260, %v1263
      %vm1265 = vweird.f32 %v1073
      %vm1266 = vweird.f32 %v1260
      %vm1267 = vmor %vm1265, %vm1266
      %v1268 = vsel %vm1267, %v1260, %v1264
      %v1269 = vand.u32 2147483647, %v1073
      %vm1270 = vcmp.eq.f32.partialorder %v1269, 8.507059e+37
      %v1271 = vand.u32 %v1073, 2147483648
      %v1272 = vor.u32 1.1754944e-38, %v1271
      %v1273 = vsel %vm1270, %v1272, %v1268
      %v1274 = vmul.f32 1.0, %v1273
      %v1275 = vrcp.pop %v1074
      %v1276 = vmul.f32 %v1074, %v1275
      %v1277 = vsub.f32 1.0, %v1276
      %v1278 = vmul.f32 %v1275, %v1277
      %v1279 = vadd.f32 %v1275, %v1278
      %vm1280 = vweird.f32 %v1074
      %vm1281 = vweird.f32 %v1275
      %vm1282 = vmor %vm1280, %vm1281
      %v1283 = vsel %vm1282, %v1275, %v1279
      %v1284 = vand.u32 2147483647, %v1074
      %vm1285 = vcmp.eq.f32.partialorder %v1284, 8.507059e+37
      %v1286 = vand.u32 %v1074, 2147483648
      %v1287 = vor.u32 1.1754944e-38, %v1286
      %v1288 = vsel %vm1285, %v1287, %v1283
      %v1289 = vmul.f32 1.0, %v1288
      %v1290 = vrcp.pop %v1075
      %v1291 = vmul.f32 %v1075, %v1290
      %v1292 = vsub.f32 1.0, %v1291
      %v1293 = vmul.f32 %v1290, %v1292
      %v1294 = vadd.f32 %v1290, %v1293
      %vm1295 = vweird.f32 %v1075
      %vm1296 = vweird.f32 %v1290
      %vm1297 = vmor %vm1295, %vm1296
      %v1298 = vsel %vm1297, %v1290, %v1294
      %v1299 = vand.u32 2147483647, %v1075
      %vm1300 = vcmp.eq.f32.partialorder %v1299, 8.507059e+37
      %v1301 = vand.u32 %v1075, 2147483648
      %v1302 = vor.u32 1.1754944e-38, %v1301
      %v1303 = vsel %vm1300, %v1302, %v1298
      %v1304 = vmul.f32 1.0, %v1303
      %v1305 = vrcp.pop %v1076
      %v1306 = vmul.f32 %v1076, %v1305
      %v1307 = vsub.f32 1.0, %v1306
      %v1308 = vmul.f32 %v1305, %v1307
      %v1309 = vadd.f32 %v1305, %v1308
      %vm1310 = vweird.f32 %v1076
      %vm1311 = vweird.f32 %v1305
      %vm1312 = vmor %vm1310, %vm1311
      %v1313 = vsel %vm1312, %v1305, %v1309
      %v1314 = vand.u32 2147483647, %v1076
      %vm1315 = vcmp.eq.f32.partialorder %v1314, 8.507059e+37
      %v1316 = vand.u32 %v1076, 2147483648
      %v1317 = vor.u32 1.1754944e-38, %v1316
      %v1318 = vsel %vm1315, %v1317, %v1313
      %v1319 = vmul.f32 1.0, %v1318
      %v1320 = vrcp.pop %v1077
      %v1321 = vmul.f32 %v1077, %v1320
      %v1322 = vsub.f32 1.0, %v1321
      %v1323 = vmul.f32 %v1320, %v1322
      %v1324 = vadd.f32 %v1320, %v1323
      %vm1325 = vweird.f32 %v1077
      %vm1326 = vweird.f32 %v1320
      %vm1327 = vmor %vm1325, %vm1326
      %v1328 = vsel %vm1327, %v1320, %v1324
      %v1329 = vand.u32 2147483647, %v1077
      %vm1330 = vcmp.eq.f32.partialorder %v1329, 8.507059e+37
      %v1331 = vand.u32 %v1077, 2147483648
      %v1332 = vor.u32 1.1754944e-38, %v1331
      %v1333 = vsel %vm1330, %v1332, %v1328
      %v1334 = vmul.f32 1.0, %v1333
      %v1335 = vrcp.pop %v1078
      %v1336 = vmul.f32 %v1078, %v1335
      %v1337 = vsub.f32 1.0, %v1336
      %v1338 = vmul.f32 %v1335, %v1337
      %v1339 = vadd.f32 %v1335, %v1338
      %vm1340 = vweird.f32 %v1078
      %vm1341 = vweird.f32 %v1335
      %vm1342 = vmor %vm1340, %vm1341
      %v1343 = vsel %vm1342, %v1335, %v1339
      %v1344 = vand.u32 2147483647, %v1078
      %vm1345 = vcmp.eq.f32.partialorder %v1344, 8.507059e+37
      %v1346 = vand.u32 %v1078, 2147483648
      %v1347 = vor.u32 1.1754944e-38, %v1346
      %v1348 = vsel %vm1345, %v1347, %v1343
      %v1349 = vmul.f32 1.0, %v1348
      %v1350 = vrcp.pop %v1079
      %v1351 = vmul.f32 %v1079, %v1350
      %v1352 = vsub.f32 1.0, %v1351
      %v1353 = vmul.f32 %v1350, %v1352
      %v1354 = vadd.f32 %v1350, %v1353
      %vm1355 = vweird.f32 %v1079
      %vm1356 = vweird.f32 %v1350
      %vm1357 = vmor %vm1355, %vm1356
      %v1358 = vsel %vm1357, %v1350, %v1354
      %v1359 = vand.u32 2147483647, %v1079
      %vm1360 = vcmp.eq.f32.partialorder %v1359, 8.507059e+37
      %v1361 = vand.u32 %v1079, 2147483648
      %v1362 = vor.u32 1.1754944e-38, %v1361
      %v1363 = vsel %vm1360, %v1362, %v1358
      %v1364 = vmul.f32 1.0, %v1363
      %1365 = vst [vmem:[%s334] sm:$0xff] %v1094
      %1366 = vst [vmem:[%s334 + $0x8] sm:$0xff] %v1109
      %1367 = vst [vmem:[%s334 + $0x10] sm:$0xff] %v1124
      %1368 = vst [vmem:[%s334 + $0x18] sm:$0xff] %v1139
      %1369 = vst [vmem:[%s334 + $0x20] sm:$0xff] %v1154
      %1370 = vst [vmem:[%s334 + $0x28] sm:$0xff] %v1169
      %1371 = vst [vmem:[%s334 + $0x30] sm:$0xff] %v1184
      %1372 = vst [vmem:[%s334 + $0x38] sm:$0xff] %v1199
      %1373 = vst [vmem:[%s334 + $0x40] sm:$0xff] %v1214
      %1374 = vst [vmem:[%s334 + $0x48] sm:$0xff] %v1229
      %1375 = vst [vmem:[%s334 + $0x50] sm:$0xff] %v1244
      %1376 = vst [vmem:[%s334 + $0x58] sm:$0xff] %v1259
      %1377 = vst [vmem:[%s334 + $0x60] sm:$0xff] %v1274
      %1378 = vst [vmem:[%s334 + $0x68] sm:$0xff] %v1289
      %1379 = vst [vmem:[%s334 + $0x70] sm:$0xff] %v1304
      %1380 = vst [vmem:[%s334 + $0x78] sm:$0xff] %v1319
      %1381 = vst [vmem:[%s334 + $0x80] sm:$0xff] %v1334
      %1382 = vst [vmem:[%s334 + $0x88] sm:$0xff] %v1349
      %1383 = vst [vmem:[%s334 + $0x90] sm:$0xff] %v1364
      %s1384 = smul.u32 19, %s20
      %p1385 = scmp.lt.s32.totalorder %s1384, 37
      %s1386 = scalar_select %p1385, %s1384, 37
      %s1387 = smul.addr %s1386, 8
      %s1388 = scalar_lea.vmem %s9, %s1387
      // Predicated region
      $region57: #{mlp_forward.1} parent=55 // pred_check
        %p1389 = pneg %p232
      $region58: #{mlp_forward.1} parent=55 // pred_check_branch
        %1391 = sbr.rel (%p1389) target = $region60
      $region59: #{mlp_forward.1} parent=55 // pred_region
        %s1392 = smul.u32 19, %s20
      $region60: #{mlp_forward.1} parent=55 // pred_fallthru
        _
    $region56: #{mlp_forward.1} parent=5 // pred_fallthru
      _
    %p1393 = scmp.le.s32.totalorder 2, %s15
    // Predicated region
    $region61: #{mlp_forward.1} parent=5 // pred_check
      %p1394 = pneg %p1393
    $region62: #{mlp_forward.1} parent=5 // pred_check_branch
      %1396 = sbr.rel (%p1394) target = $region64
    $region63: #{mlp_forward.1} parent=5 // pred_region
      %s1397 = ssub.s32 %s15, 2
      // Predicated region
      $region65: #{mlp_forward.1} parent=63 // pred_check
        %p1398 = pneg %p238
      $region66: #{mlp_forward.1} parent=63 // pred_check_branch
        %1400 = sbr.rel (%p1398) target = $region68
      $region67: #{mlp_forward.1} parent=63 // pred_region
        %s1401 = smul.u32 19, %s21
        %p1402 = scmp.lt.s32.totalorder %s1401, 37
        %s1403 = scalar_select %p1402, %s1401, 37
        %s1404 = smul.addr %s1403, 8
        %s1405 = scalar_lea.vmem %s9, %s1404
      $region68: #{mlp_forward.1} parent=63 // pred_fallthru
        _
    $region64: #{mlp_forward.1} parent=5 // pred_fallthru
      _
  $region6: #{mlp_forward.1} parent=0 // loop_footer
    %s19 = sadd.s32 1, %s15
  $region7: #{mlp_forward.1} parent=0 // loop_footer_branch
    %14 = sbr.rel target = $region3
  $region8: #{mlp_forward.1} parent=0 // loop_exit
    _

</llo_original>
